<compile_context>
chip_gen: v6e
topology: v6e:2x2x1
jax: 0.10.0
libtpu: 0.0.40
codegen_flags: <defaults>
</compile_context>

<pallas_src>
import functools

import jax
import jax.numpy as jnp
from jax.experimental import pallas as pl
from jax.experimental.pallas import tpu as pltpu

_LANE = 128


def _round_up(x, m):
    return (x + m - 1) // m * m


def _mlp_kernel(x_ref, w1_ref, b1_ref, w2_ref, b2_ref, w3_ref, b3_ref, o_ref):
    # Whole fused forward pass for one batch tile (all operands lane-padded to 128).
    x = x_ref[...]
    h1 = jnp.dot(x, w1_ref[...], preferred_element_type=jnp.float32) + b1_ref[...]
    h1 = jnp.maximum(h1, 0.0)                                   # ReLU
    h2 = jnp.dot(h1, w2_ref[...], preferred_element_type=jnp.float32) + b2_ref[...]
    h2 = jnp.maximum(h2, 0.0)                                   # ReLU
    q = jnp.dot(h2, w3_ref[...], preferred_element_type=jnp.float32) + b3_ref[...]
    o_ref[...] = q.astype(o_ref.dtype)


def _pick_tile_b(B):
    """Largest useful batch tile: fill VMEM-sized tiles but keep >=2 grid steps
    when the batch permits so v7x megacore can shard the 'parallel' axis."""
    B8 = _round_up(B, 8)
    if B8 < 16:
        return B8
    return min(512, _round_up(-(-B8 // 2), 8))


@functools.partial(jax.jit, static_argnames=("tile_b",))
def neural_network_forward(x, params, tile_b=None):
    """Fused 3-linear-layer MLP (2 hidden layers + ReLU) as a single Pallas kernel.

    x:      [B, state_size] float32
    params: dict with w1 [S,N], b1 [1,N], w2 [N,N], b2 [1,N], w3 [N,A], b3 [1,A]
    returns Q_values [B, action_size] float32
    """
    w1, b1 = params["w1"], params["b1"]
    w2, b2 = params["w2"], params["b2"]
    w3, b3 = params["w3"], params["b3"]

    B, S = x.shape
    N = w1.shape[1]
    A = w3.shape[1]

    if tile_b is None:
        tile_b = _pick_tile_b(B)

    # Lane-dense padding (exact for Linear + ReLU: padded lanes stay identically 0
    # through every layer and padded batch rows / output cols are sliced off below).
    S_p = _round_up(S, _LANE)
    N_p = _round_up(N, _LANE)
    A_p = _round_up(A, _LANE)
    B_p = _round_up(B, tile_b)

    f32 = jnp.float32
    xp = jnp.zeros((B_p, S_p), f32).at[:B, :S].set(x.astype(f32))
    w1p = jnp.zeros((S_p, N_p), f32).at[:S, :N].set(w1)
    b1p = jnp.zeros((1, N_p), f32).at[:, :N].set(b1)
    w2p = jnp.zeros((N_p, N_p), f32).at[:N, :N].set(w2)
    b2p = jnp.zeros((1, N_p), f32).at[:, :N].set(b2)
    w3p = jnp.zeros((N_p, A_p), f32).at[:N, :A].set(w3)
    b3p = jnp.zeros((1, A_p), f32).at[:, :A].set(b3)

    grid = (B_p // tile_b,)

    # Batch is tiled over the grid; weights/biases use a constant index_map so the
    # same (small) blocks stay resident in VMEM across all grid steps.
    out = pl.pallas_call(
        _mlp_kernel,
        out_shape=jax.ShapeDtypeStruct((B_p, A_p), f32),
        grid_spec=pltpu.PrefetchScalarGridSpec(
            num_scalar_prefetch=0,
            grid=grid,
            in_specs=[
                pl.BlockSpec((tile_b, S_p), lambda i: (i, 0)),   # x tile
                pl.BlockSpec((S_p, N_p), lambda i: (0, 0)),      # w1
                pl.BlockSpec((1, N_p), lambda i: (0, 0)),        # b1
                pl.BlockSpec((N_p, N_p), lambda i: (0, 0)),      # w2
                pl.BlockSpec((1, N_p), lambda i: (0, 0)),        # b2
                pl.BlockSpec((N_p, A_p), lambda i: (0, 0)),      # w3
                pl.BlockSpec((1, A_p), lambda i: (0, 0)),        # b3
            ],
            out_specs=pl.BlockSpec((tile_b, A_p), lambda i: (i, 0)),  # lane-dense slab
        ),
        compiler_params=pltpu.CompilerParams(
            dimension_semantics=("parallel",),
        ),
    )(xp, w1p, b1p, w2p, b2p, w3p, b3p)

    # Strip batch / action padding outside the kernel.
    return out[:B, :A]


def init_params(key, state_size, nodes, action_size):
    """Deterministic init mimicking nn.Linear's U(-1/sqrt(fan_in), 1/sqrt(fan_in))."""
    ks = jax.random.split(key, 6)

    def linear(kw, kb, fan_in, fan_out):
        bound = 1.0 / (fan_in ** 0.5)
        w = jax.random.uniform(kw, (fan_in, fan_out), jnp.float32, -bound, bound)
        b = jax.random.uniform(kb, (1, fan_out), jnp.float32, -bound, bound)
        return w, b

    w1, b1 = linear(ks[0], ks[1], state_size, nodes)
    w2, b2 = linear(ks[2], ks[3], nodes, nodes)
    w3, b3 = linear(ks[4], ks[5], nodes, action_size)
    return {"w1": w1, "b1": b1, "w2": w2, "b2": b2, "w3": w3, "b3": b3}


def reference_forward(x, p):
    h1 = jnp.maximum(x @ p["w1"] + p["b1"], 0.0)
    h2 = jnp.maximum(h1 @ p["w2"] + p["b2"], 0.0)
    return h2 @ p["w3"] + p["b3"]


if __name__ == "__main__":
    # Shapes consistent with the module: state_size=16, nodes=32, action_size=4.
    # B=64 gives an auto tile of 32 rows -> 2 grid steps (both TCs used on v7x).
    B, STATE, NODES, ACTIONS = 64, 16, 32, 4

    key = jax.random.PRNGKey(0)
    kx, kp = jax.random.split(key)
    x = jax.random.normal(kx, (B, STATE), jnp.float32)
    params = init_params(kp, STATE, NODES, ACTIONS)

    q = neural_network_forward(x, params)        # auto tile_b (>=2 grid steps)
    q = jax.block_until_ready(q)

    q_ref = reference_forward(x, params)
    assert q.shape == (B, ACTIONS)
    assert jnp.allclose(q, q_ref, atol=1e-5, rtol=1e-5), "mismatch vs reference"

    # Also exercise an odd batch (exercises batch padding path).
    x_odd = jax.random.normal(kx, (10, STATE), jnp.float32)
    q_odd = jax.block_until_ready(neural_network_forward(x_odd, params))
    assert jnp.allclose(q_odd, reference_forward(x_odd, params), atol=1e-5, rtol=1e-5)

    print("KERNEL_OK")
</pallas_src>

<mosaic_0001>
module attributes {stable_mosaic.version = 11 : i64} {
  func.func @_mlp_kernel(%arg0: i32, %arg1: memref<32x128xf32, #tpu.memory_space<vmem>>, %arg2: memref<128x128xf32, #tpu.memory_space<vmem>>, %arg3: memref<1x128xf32, #tpu.memory_space<vmem>>, %arg4: memref<128x128xf32, #tpu.memory_space<vmem>>, %arg5: memref<1x128xf32, #tpu.memory_space<vmem>>, %arg6: memref<128x128xf32, #tpu.memory_space<vmem>>, %arg7: memref<1x128xf32, #tpu.memory_space<vmem>>, %arg8: memref<32x128xf32, #tpu.memory_space<vmem>>) attributes {dimension_semantics = [#tpu.dimension_semantics<parallel>], iteration_bounds = array<i64: 2>, scalar_prefetch = 0 : i64, scratch_operands = 0 : i64, tpu.core_type = #tpu.core_type<tc>, window_params = [{transform_indices = @transform_0, window_bounds = array<i64: 32, 128>}, {pipeline_mode = #tpu.pipeline_mode<synchronous>, transform_indices = @transform_1, window_bounds = array<i64: 128, 128>}, {pipeline_mode = #tpu.pipeline_mode<synchronous>, transform_indices = @transform_2, window_bounds = array<i64: 1, 128>}, {pipeline_mode = #tpu.pipeline_mode<synchronous>, transform_indices = @transform_3, window_bounds = array<i64: 128, 128>}, {pipeline_mode = #tpu.pipeline_mode<synchronous>, transform_indices = @transform_4, window_bounds = array<i64: 1, 128>}, {pipeline_mode = #tpu.pipeline_mode<synchronous>, transform_indices = @transform_5, window_bounds = array<i64: 128, 128>}, {pipeline_mode = #tpu.pipeline_mode<synchronous>, transform_indices = @transform_6, window_bounds = array<i64: 1, 128>}, {transform_indices = @transform_7, window_bounds = array<i64: 32, 128>}]} {
    %c0 = arith.constant 0 : index
    %c0_0 = arith.constant 0 : index
    %0 = vector.load %arg1[%c0, %c0_0] : memref<32x128xf32, #tpu.memory_space<vmem>>, vector<32x128xf32>
    %c0_1 = arith.constant 0 : index
    %c0_2 = arith.constant 0 : index
    %1 = vector.load %arg2[%c0_1, %c0_2] : memref<128x128xf32, #tpu.memory_space<vmem>>, vector<128x128xf32>
    %cst = arith.constant dense<0.000000e+00> : vector<32x128xf32>
    %2 = tpu.matmul %0, %1, %cst {dimension_numbers = #tpu.dot_dimension_numbers<[1], [0], [0], [1], [0, 0, 1, 1], [], []>} : vector<32x128xf32>, vector<128x128xf32>, vector<32x128xf32> -> vector<32x128xf32>
    %c0_3 = arith.constant 0 : index
    %c0_4 = arith.constant 0 : index
    %3 = vector.load %arg3[%c0_3, %c0_4] : memref<1x128xf32, #tpu.memory_space<vmem>>, vector<1x128xf32>
    %4 = vector.broadcast %3 : vector<1x128xf32> to vector<32x128xf32>
    %5 = arith.addf %2, %4 : vector<32x128xf32>
    %cst_5 = arith.constant 0.000000e+00 : f32
    %6 = vector.broadcast %cst_5 : f32 to vector<32x128xf32>
    %7 = arith.maximumf %5, %6 : vector<32x128xf32>
    %c0_6 = arith.constant 0 : index
    %c0_7 = arith.constant 0 : index
    %8 = vector.load %arg4[%c0_6, %c0_7] : memref<128x128xf32, #tpu.memory_space<vmem>>, vector<128x128xf32>
    %cst_8 = arith.constant dense<0.000000e+00> : vector<32x128xf32>
    %9 = tpu.matmul %7, %8, %cst_8 {dimension_numbers = #tpu.dot_dimension_numbers<[1], [0], [0], [1], [0, 0, 1, 1], [], []>} : vector<32x128xf32>, vector<128x128xf32>, vector<32x128xf32> -> vector<32x128xf32>
    %c0_9 = arith.constant 0 : index
    %c0_10 = arith.constant 0 : index
    %10 = vector.load %arg5[%c0_9, %c0_10] : memref<1x128xf32, #tpu.memory_space<vmem>>, vector<1x128xf32>
    %11 = vector.broadcast %10 : vector<1x128xf32> to vector<32x128xf32>
    %12 = arith.addf %9, %11 : vector<32x128xf32>
    %cst_11 = arith.constant 0.000000e+00 : f32
    %13 = vector.broadcast %cst_11 : f32 to vector<32x128xf32>
    %14 = arith.maximumf %12, %13 : vector<32x128xf32>
    %c0_12 = arith.constant 0 : index
    %c0_13 = arith.constant 0 : index
    %15 = vector.load %arg6[%c0_12, %c0_13] : memref<128x128xf32, #tpu.memory_space<vmem>>, vector<128x128xf32>
    %cst_14 = arith.constant dense<0.000000e+00> : vector<32x128xf32>
    %16 = tpu.matmul %14, %15, %cst_14 {dimension_numbers = #tpu.dot_dimension_numbers<[1], [0], [0], [1], [0, 0, 1, 1], [], []>} : vector<32x128xf32>, vector<128x128xf32>, vector<32x128xf32> -> vector<32x128xf32>
    %c0_15 = arith.constant 0 : index
    %c0_16 = arith.constant 0 : index
    %17 = vector.load %arg7[%c0_15, %c0_16] : memref<1x128xf32, #tpu.memory_space<vmem>>, vector<1x128xf32>
    %18 = vector.broadcast %17 : vector<1x128xf32> to vector<32x128xf32>
    %19 = arith.addf %16, %18 : vector<32x128xf32>
    %c0_17 = arith.constant 0 : index
    %c0_18 = arith.constant 0 : index
    %20 = vector.load %arg8[%c0_17, %c0_18] : memref<32x128xf32, #tpu.memory_space<vmem>>, vector<32x128xf32>
    tpu.vector_store %arg8[%c0_17, %c0_18], %19 {strides = array<i32>} : memref<32x128xf32, #tpu.memory_space<vmem>>, vector<32x128xf32>,
    return
  }
  func.func @transform_0(%arg0: i32) -> (i32, i32) {
    %c0_i32 = arith.constant 0 : i32
    %c0_i32_0 = arith.constant 0 : i32
    return %arg0, %c0_i32 : i32, i32
  }
  func.func @transform_1(%arg0: i32) -> (i32, i32) {
    %c0_i32 = arith.constant 0 : i32
    %c0_i32_0 = arith.constant 0 : i32
    %c0_i32_1 = arith.constant 0 : i32
    return %c0_i32, %c0_i32_0 : i32, i32
  }
  func.func @transform_2(%arg0: i32) -> (i32, i32) {
    %c0_i32 = arith.constant 0 : i32
    %c0_i32_0 = arith.constant 0 : i32
    %c0_i32_1 = arith.constant 0 : i32
    return %c0_i32, %c0_i32_0 : i32, i32
  }
  func.func @transform_3(%arg0: i32) -> (i32, i32) {
    %c0_i32 = arith.constant 0 : i32
    %c0_i32_0 = arith.constant 0 : i32
    %c0_i32_1 = arith.constant 0 : i32
    return %c0_i32, %c0_i32_0 : i32, i32
  }
  func.func @transform_4(%arg0: i32) -> (i32, i32) {
    %c0_i32 = arith.constant 0 : i32
    %c0_i32_0 = arith.constant 0 : i32
    %c0_i32_1 = arith.constant 0 : i32
    return %c0_i32, %c0_i32_0 : i32, i32
  }
  func.func @transform_5(%arg0: i32) -> (i32, i32) {
    %c0_i32 = arith.constant 0 : i32
    %c0_i32_0 = arith.constant 0 : i32
    %c0_i32_1 = arith.constant 0 : i32
    return %c0_i32, %c0_i32_0 : i32, i32
  }
  func.func @transform_6(%arg0: i32) -> (i32, i32) {
    %c0_i32 = arith.constant 0 : i32
    %c0_i32_0 = arith.constant 0 : i32
    %c0_i32_1 = arith.constant 0 : i32
    return %c0_i32, %c0_i32_0 : i32, i32
  }
  func.func @transform_7(%arg0: i32) -> (i32, i32) {
    %c0_i32 = arith.constant 0 : i32
    %c0_i32_0 = arith.constant 0 : i32
    return %arg0, %c0_i32 : i32, i32
  }
}

</mosaic_0001>

<llo_original>
// kernel: neural_network_forward.1
$region0: #{neural_network_forward.1}
  #allocation0 [shape = 'u32[]', space=smem, size = 0x4, offset = 0x4, fixed_abs, tag = 'smem constant byte address 0x4 - core index']
  #allocation1 [shape = 'u32[144,128]{1,0:T(1,128)}', space=vmem, size = 0x12000, scoped, tag = 'internal scratch']
  %s0 = inlined_call_operand.vmem [shape: f32[64,128], index: 0, kind: input, shape index: {}]
  %s1 = inlined_call_operand.vmem [shape: f32[128,128], index: 1, kind: input, shape index: {}]
  %s2 = inlined_call_operand.vmem [shape: f32[1,128], index: 2, kind: input, shape index: {}]
  %s3 = inlined_call_operand.vmem [shape: f32[128,128], index: 3, kind: input, shape index: {}]
  %s4 = inlined_call_operand.vmem [shape: f32[1,128], index: 4, kind: input, shape index: {}]
  %s5 = inlined_call_operand.vmem [shape: f32[128,128], index: 5, kind: input, shape index: {}]
  %s6 = inlined_call_operand.vmem [shape: f32[1,128], index: 6, kind: input, shape index: {}]
  %s7 = inlined_call_operand.vmem [shape: f32[64,128], index: 7, kind: output, shape index: {}]
  %s8 = sld [smem:[#allocation0]]
  $region61: #{neural_network_forward.1} parent=0
    _
  %s10 = ssub.s32 1, %s8
  %s11 = scalar_select 0, %s10, %s8
  loop: start=0, step=1, limit=4
  $region2: #{neural_network_forward.1} parent=0 // loop_pre_header
    _
  $region3: #{neural_network_forward.1} parent=0 // loop_header
    %s13 = sphi 0, %s17
    %p14 = scmp.ge.s32.totalorder %s13, 4
    %s23 = sphi 0, %s25
    %s26 = sphi 0, %s23
    %s27 = sphi 0, %s26
    %s43 = sphi 0, %s27
    %s47 = sphi 0, %s47
    %s49 = sphi 0, %s47
    %s50 = sphi 0, %s49
    %s64 = sphi 0, %s50
    %s68 = sphi 0, %s68
    %s70 = sphi 0, %s68
    %s71 = sphi 0, %s70
    %s85 = sphi 0, %s71
    %s89 = sphi 0, %s89
    %s91 = sphi 0, %s89
    %s92 = sphi 0, %s91
    %s106 = sphi 0, %s92
    %s110 = sphi 0, %s110
    %s112 = sphi 0, %s110
    %s113 = sphi 0, %s112
    %s127 = sphi 0, %s113
    %s131 = sphi 0, %s131
    %s133 = sphi 0, %s131
    %s134 = sphi 0, %s133
    %s148 = sphi 0, %s134
    %s152 = sphi 0, %s152
    %s154 = sphi 0, %s152
    %s155 = sphi 0, %s154
    %s169 = sphi 0, %s155
    %s175 = sphi 0, %s177
    %s178 = sphi 0, %s175
    %s179 = sphi 0, %s178
    %s195 = sphi 0, %s179
  $region4: #{neural_network_forward.1} parent=0 // loop_header_branch
    %16 = sbr.rel (%p14) target = $region8
  $region5: #{neural_network_forward.1} parent=0 // loop_body
    %s18 = ssub.s32 %s13, 1
    %s19 = ssub.s32 %s13, 2
    %s20 = sadd.s32 %s13, 1
    %s21 = ssub.s32 %s13, %s20
    %p22 = scmp.eq.s32.totalorder %s21, 0
    %s24 = sadd.s32 %s23, 1
    %s25 = scalar_select %p22, %s23, %s24
    %p28 = pneg %p22
    %p29 = scmp.eq.s32.totalorder %s13, 1
    %p30 = por %p28, %p29
    %p31 = scmp.ne.s32.totalorder %s23, %s26
    %p32 = scmp.eq.s32.totalorder %s13, 0
    %p33 = por %p31, %p32
    %p34 = scmp.ne.s32.totalorder %s23, %s26
    %p35 = scmp.eq.s32.totalorder %s18, 1
    %p36 = por %p34, %p35
    %p37 = scmp.ne.s32.totalorder %s26, %s27
    %p38 = scmp.eq.s32.totalorder %s18, 0
    %p39 = por %p37, %p38
    %p40 = scmp.ne.s32.totalorder %s26, %s27
    %p41 = scmp.eq.s32.totalorder %s19, 1
    %p42 = por %p40, %p41
    %p44 = scmp.ne.s32.totalorder %s27, %s43
    %p45 = scmp.eq.s32.totalorder %s19, 0
    %p46 = por %p44, %p45
    %s48 = sadd.s32 %s47, 1
    %p51 = scmp.eq.s32.totalorder %s13, 1
    %p52 = scmp.ne.s32.totalorder %s47, %s49
    %p53 = scmp.eq.s32.totalorder %s13, 0
    %p54 = por %p52, %p53
    %p55 = scmp.ne.s32.totalorder %s47, %s49
    %p56 = scmp.eq.s32.totalorder %s18, 1
    %p57 = por %p55, %p56
    %p58 = scmp.ne.s32.totalorder %s49, %s50
    %p59 = scmp.eq.s32.totalorder %s18, 0
    %p60 = por %p58, %p59
    %p61 = scmp.ne.s32.totalorder %s49, %s50
    %p62 = scmp.eq.s32.totalorder %s19, 1
    %p63 = por %p61, %p62
    %p65 = scmp.ne.s32.totalorder %s50, %s64
    %p66 = scmp.eq.s32.totalorder %s19, 0
    %p67 = por %p65, %p66
    %s69 = sadd.s32 %s68, 1
    %p72 = scmp.eq.s32.totalorder %s13, 1
    %p73 = scmp.ne.s32.totalorder %s68, %s70
    %p74 = scmp.eq.s32.totalorder %s13, 0
    %p75 = por %p73, %p74
    %p76 = scmp.ne.s32.totalorder %s68, %s70
    %p77 = scmp.eq.s32.totalorder %s18, 1
    %p78 = por %p76, %p77
    %p79 = scmp.ne.s32.totalorder %s70, %s71
    %p80 = scmp.eq.s32.totalorder %s18, 0
    %p81 = por %p79, %p80
    %p82 = scmp.ne.s32.totalorder %s70, %s71
    %p83 = scmp.eq.s32.totalorder %s19, 1
    %p84 = por %p82, %p83
    %p86 = scmp.ne.s32.totalorder %s71, %s85
    %p87 = scmp.eq.s32.totalorder %s19, 0
    %p88 = por %p86, %p87
    %s90 = sadd.s32 %s89, 1
    %p93 = scmp.eq.s32.totalorder %s13, 1
    %p94 = scmp.ne.s32.totalorder %s89, %s91
    %p95 = scmp.eq.s32.totalorder %s13, 0
    %p96 = por %p94, %p95
    %p97 = scmp.ne.s32.totalorder %s89, %s91
    %p98 = scmp.eq.s32.totalorder %s18, 1
    %p99 = por %p97, %p98
    %p100 = scmp.ne.s32.totalorder %s91, %s92
    %p101 = scmp.eq.s32.totalorder %s18, 0
    %p102 = por %p100, %p101
    %p103 = scmp.ne.s32.totalorder %s91, %s92
    %p104 = scmp.eq.s32.totalorder %s19, 1
    %p105 = por %p103, %p104
    %p107 = scmp.ne.s32.totalorder %s92, %s106
    %p108 = scmp.eq.s32.totalorder %s19, 0
    %p109 = por %p107, %p108
    %s111 = sadd.s32 %s110, 1
    %p114 = scmp.eq.s32.totalorder %s13, 1
    %p115 = scmp.ne.s32.totalorder %s110, %s112
    %p116 = scmp.eq.s32.totalorder %s13, 0
    %p117 = por %p115, %p116
    %p118 = scmp.ne.s32.totalorder %s110, %s112
    %p119 = scmp.eq.s32.totalorder %s18, 1
    %p120 = por %p118, %p119
    %p121 = scmp.ne.s32.totalorder %s112, %s113
    %p122 = scmp.eq.s32.totalorder %s18, 0
    %p123 = por %p121, %p122
    %p124 = scmp.ne.s32.totalorder %s112, %s113
    %p125 = scmp.eq.s32.totalorder %s19, 1
    %p126 = por %p124, %p125
    %p128 = scmp.ne.s32.totalorder %s113, %s127
    %p129 = scmp.eq.s32.totalorder %s19, 0
    %p130 = por %p128, %p129
    %s132 = sadd.s32 %s131, 1
    %p135 = scmp.eq.s32.totalorder %s13, 1
    %p136 = scmp.ne.s32.totalorder %s131, %s133
    %p137 = scmp.eq.s32.totalorder %s13, 0
    %p138 = por %p136, %p137
    %p139 = scmp.ne.s32.totalorder %s131, %s133
    %p140 = scmp.eq.s32.totalorder %s18, 1
    %p141 = por %p139, %p140
    %p142 = scmp.ne.s32.totalorder %s133, %s134
    %p143 = scmp.eq.s32.totalorder %s18, 0
    %p144 = por %p142, %p143
    %p145 = scmp.ne.s32.totalorder %s133, %s134
    %p146 = scmp.eq.s32.totalorder %s19, 1
    %p147 = por %p145, %p146
    %p149 = scmp.ne.s32.totalorder %s134, %s148
    %p150 = scmp.eq.s32.totalorder %s19, 0
    %p151 = por %p149, %p150
    %s153 = sadd.s32 %s152, 1
    %p156 = scmp.eq.s32.totalorder %s13, 1
    %p157 = scmp.ne.s32.totalorder %s152, %s154
    %p158 = scmp.eq.s32.totalorder %s13, 0
    %p159 = por %p157, %p158
    %p160 = scmp.ne.s32.totalorder %s152, %s154
    %p161 = scmp.eq.s32.totalorder %s18, 1
    %p162 = por %p160, %p161
    %p163 = scmp.ne.s32.totalorder %s154, %s155
    %p164 = scmp.eq.s32.totalorder %s18, 0
    %p165 = por %p163, %p164
    %p166 = scmp.ne.s32.totalorder %s154, %s155
    %p167 = scmp.eq.s32.totalorder %s19, 1
    %p168 = por %p166, %p167
    %p170 = scmp.ne.s32.totalorder %s155, %s169
    %p171 = scmp.eq.s32.totalorder %s19, 0
    %p172 = por %p170, %p171
    %s173 = ssub.s32 %s13, %s20
    %p174 = scmp.eq.s32.totalorder %s173, 0
    %s176 = sadd.s32 %s175, 1
    %s177 = scalar_select %p174, %s175, %s176
    %p180 = pneg %p174
    %p181 = scmp.eq.s32.totalorder %s13, 1
    %p182 = por %p180, %p181
    %p183 = scmp.ne.s32.totalorder %s175, %s178
    %p184 = scmp.eq.s32.totalorder %s13, 0
    %p185 = por %p183, %p184
    %p186 = scmp.ne.s32.totalorder %s175, %s178
    %p187 = scmp.eq.s32.totalorder %s18, 1
    %p188 = por %p186, %p187
    %p189 = scmp.ne.s32.totalorder %s178, %s179
    %p190 = scmp.eq.s32.totalorder %s18, 0
    %p191 = por %p189, %p190
    %p192 = scmp.ne.s32.totalorder %s178, %s179
    %p193 = scmp.eq.s32.totalorder %s19, 1
    %p194 = por %p192, %p193
    %p196 = scmp.ne.s32.totalorder %s179, %s195
    %p197 = scmp.eq.s32.totalorder %s19, 0
    %p198 = por %p196, %p197
    %p199 = scmp.le.s32.totalorder 1, %s13
    %p200 = scmp.lt.s32.totalorder %s13, 3
    %p201 = pnand %p199, %p200
    %p202 = pneg %p201
    // Predicated region
    $region9: #{neural_network_forward.1} parent=5 // pred_check
      _
    $region10: #{neural_network_forward.1} parent=5 // pred_check_branch
      %204 = sbr.rel (%p201) target = $region12
    $region11: #{neural_network_forward.1} parent=5 // pred_region
      %s205 = ssub.s32 %s13, 1
      // Predicated region
      $region13: #{neural_network_forward.1} parent=11 // pred_check
        %p206 = pneg %p60
      $region14: #{neural_network_forward.1} parent=11 // pred_check_branch
        %208 = sbr.rel (%p206) target = $region16
      $region15: #{neural_network_forward.1} parent=11 // pred_region
        _
      $region16: #{neural_network_forward.1} parent=11 // pred_fallthru
        _
      // Predicated region
      $region17: #{neural_network_forward.1} parent=11 // pred_check
        %p209 = pneg %p81
      $region18: #{neural_network_forward.1} parent=11 // pred_check_branch
        %211 = sbr.rel (%p209) target = $region20
      $region19: #{neural_network_forward.1} parent=11 // pred_region
        _
      $region20: #{neural_network_forward.1} parent=11 // pred_fallthru
        _
      // Predicated region
      $region21: #{neural_network_forward.1} parent=11 // pred_check
        %p212 = pneg %p102
      $region22: #{neural_network_forward.1} parent=11 // pred_check_branch
        %214 = sbr.rel (%p212) target = $region24
      $region23: #{neural_network_forward.1} parent=11 // pred_region
        _
      $region24: #{neural_network_forward.1} parent=11 // pred_fallthru
        _
      // Predicated region
      $region25: #{neural_network_forward.1} parent=11 // pred_check
        %p215 = pneg %p123
      $region26: #{neural_network_forward.1} parent=11 // pred_check_branch
        %217 = sbr.rel (%p215) target = $region28
      $region27: #{neural_network_forward.1} parent=11 // pred_region
        _
      $region28: #{neural_network_forward.1} parent=11 // pred_fallthru
        _
      // Predicated region
      $region29: #{neural_network_forward.1} parent=11 // pred_check
        %p218 = pneg %p144
      $region30: #{neural_network_forward.1} parent=11 // pred_check_branch
        %220 = sbr.rel (%p218) target = $region32
      $region31: #{neural_network_forward.1} parent=11 // pred_region
        _
      $region32: #{neural_network_forward.1} parent=11 // pred_fallthru
        _
      // Predicated region
      $region33: #{neural_network_forward.1} parent=11 // pred_check
        %p221 = pneg %p165
      $region34: #{neural_network_forward.1} parent=11 // pred_check_branch
        %223 = sbr.rel (%p221) target = $region36
      $region35: #{neural_network_forward.1} parent=11 // pred_region
        _
      $region36: #{neural_network_forward.1} parent=11 // pred_fallthru
        _
    $region12: #{neural_network_forward.1} parent=5 // pred_fallthru
      _
    %p224 = scmp.lt.s32.totalorder %s13, 2
    // Predicated region
    $region37: #{neural_network_forward.1} parent=5 // pred_check
      %p225 = pneg %p224
    $region38: #{neural_network_forward.1} parent=5 // pred_check_branch
      %227 = sbr.rel (%p225) target = $region40
    $region39: #{neural_network_forward.1} parent=5 // pred_region
      // Predicated region
      $region41: #{neural_network_forward.1} parent=39 // pred_check
        %p228 = pneg %p33
      $region42: #{neural_network_forward.1} parent=39 // pred_check_branch
        %230 = sbr.rel (%p228) target = $region44
      $region43: #{neural_network_forward.1} parent=39 // pred_region
        %s231 = smul.u32 4, %s13
        %p232 = scmp.lt.s32.totalorder %s231, 7
        %s233 = scalar_select %p232, %s231, 7
        %s234 = smul.addr %s233, 8
        %s235 = scalar_lea.vmem %s0, %s234
        %s236 = smul.u32 4, %s13
      $region44: #{neural_network_forward.1} parent=39 // pred_fallthru
        _
    $region40: #{neural_network_forward.1} parent=5 // pred_fallthru
      _
    %p237 = scmp.le.s32.totalorder 1, %s13
    %p238 = scmp.lt.s32.totalorder %s13, 3
    %p239 = pnand %p237, %p238
    %p240 = pneg %p239
    // Predicated region
    $region45: #{neural_network_forward.1} parent=5 // pred_check
      _
    $region46: #{neural_network_forward.1} parent=5 // pred_check_branch
      %242 = sbr.rel (%p239) target = $region48
    $region47: #{neural_network_forward.1} parent=5 // pred_region
      %s243 = ssub.s32 %s13, 1
      %s244 = smul.u32 4, %s18
      %p245 = scmp.lt.s32.totalorder %s244, 7
      %s246 = scalar_select %p245, %s244, 7
      %s247 = smul.addr %s246, 8
      %s248 = scalar_lea.vmem %s0, %s247
      %p249 = pneg %p39
      %p250 = pneg %p36
      %p251 = pneg %p60
      %p252 = pneg %p57
      %p253 = pneg %p81
      %p254 = pneg %p78
      %p255 = pneg %p102
      %p256 = pneg %p99
      %p257 = pneg %p123
      %p258 = pneg %p120
      %p259 = pneg %p144
      %p260 = pneg %p141
      %p261 = pneg %p165
      %p262 = pneg %p162
      %p263 = pneg %p191
      %p264 = pneg %p188
      %s265 = smul.u32 4, %s18
      %p266 = scmp.lt.s32.totalorder %s265, 7
      %s267 = scalar_select %p266, %s265, 7
      %s268 = smul.addr %s267, 8
      %s269 = scalar_lea.vmem %s7, %s268
      %s270 = smul.u32 4, %s18
      %p271 = scmp.lt.s32.totalorder %s270, 7
      %s272 = scalar_select %p271, %s270, 7
      %s273 = smul.addr %s272, 8
      %s274 = scalar_lea.vmem %s0, %s273
      %s275 = smul.u32 4, %s18
      %s276 = smul.u32 4, %s18
      %p277 = scmp.lt.s32.totalorder %s276, 7
      %s278 = scalar_select %p277, %s276, 7
      %s279 = smul.addr %s278, 8
      %s280 = scalar_lea.vmem %s7, %s279
      %s281 = smul.u32 4, %s18
      %v282 = vld [vmem:[%s274] sm:$0xff]
      %v283 = vld [vmem:[%s274 + $0x8] sm:$0xff]
      %v284 = vld [vmem:[%s274 + $0x10] sm:$0xff]
      %v285 = vld [vmem:[%s274 + $0x18] sm:$0xff]
      %v286 = vld [vmem:[%s1] sm:$0xff]
      %v287 = vld [vmem:[%s1 + $0x8] sm:$0xff]
      %v288 = vld [vmem:[%s1 + $0x10] sm:$0xff]
      %v289 = vld [vmem:[%s1 + $0x18] sm:$0xff]
      %v290 = vld [vmem:[%s1 + $0x20] sm:$0xff]
      %v291 = vld [vmem:[%s1 + $0x28] sm:$0xff]
      %v292 = vld [vmem:[%s1 + $0x30] sm:$0xff]
      %v293 = vld [vmem:[%s1 + $0x38] sm:$0xff]
      %v294 = vld [vmem:[%s1 + $0x40] sm:$0xff]
      %v295 = vld [vmem:[%s1 + $0x48] sm:$0xff]
      %v296 = vld [vmem:[%s1 + $0x50] sm:$0xff]
      %v297 = vld [vmem:[%s1 + $0x58] sm:$0xff]
      %v298 = vld [vmem:[%s1 + $0x60] sm:$0xff]
      %v299 = vld [vmem:[%s1 + $0x68] sm:$0xff]
      %v300 = vld [vmem:[%s1 + $0x70] sm:$0xff]
      %v301 = vld [vmem:[%s1 + $0x78] sm:$0xff]
      %v302 = vld [vmem:[%s2] sm:$0x1]
      %v304 = vlaneseq
      %v305 = vshrl.u32 %v304, 7
      %v306 = vsub.s32 0, %v305
      %v307 = vrot.slane %v302, %v306
      %309 = vmatprep.subr.mxu0 0.0
      %310 = vmatpush1.msra.mxu0 %v301
      %311 = vmatprep.subr.mxu0 0.0
      %312 = vmatpush1.msra.mxu0 %v300
      %313 = vmatprep.subr.mxu0 0.0
      %314 = vmatpush1.msra.mxu0 %v299
      %315 = vmatprep.subr.mxu0 0.0
      %316 = vmatpush1.msra.mxu0 %v298
      %317 = vmatprep.subr.mxu0 0.0
      %318 = vmatpush1.msra.mxu0 %v297
      %319 = vmatprep.subr.mxu0 0.0
      %320 = vmatpush1.msra.mxu0 %v296
      %321 = vmatprep.subr.mxu0 0.0
      %322 = vmatpush1.msra.mxu0 %v295
      %323 = vmatprep.subr.mxu0 0.0
      %324 = vmatpush1.msra.mxu0 %v294
      %325 = vmatprep.subr.mxu0 0.0
      %326 = vmatpush1.msra.mxu0 %v293
      %327 = vmatprep.subr.mxu0 0.0
      %328 = vmatpush1.msra.mxu0 %v292
      %329 = vmatprep.subr.mxu0 0.0
      %330 = vmatpush1.msra.mxu0 %v291
      %331 = vmatprep.subr.mxu0 0.0
      %332 = vmatpush1.msra.mxu0 %v290
      %333 = vmatprep.subr.mxu0 0.0
      %334 = vmatpush1.msra.mxu0 %v289
      %335 = vmatprep.subr.mxu0 0.0
      %336 = vmatpush1.msra.mxu0 %v288
      %337 = vmatprep.subr.mxu0 0.0
      %338 = vmatpush1.msra.mxu0 %v287
      %339 = vmatprep.subr.mxu0 0.0
      %340 = vmatpush1.msra.mxu0 %v286
      %341 = vmatprep.subr.mxu0 0.0
      %342 = vmatpush2.msra.mxu0 0.0
      %343 = vmatprep.subr.mxu0 0.0
      %344 = vmatpush2.msra.mxu0 0.0
      %345 = vmatprep.subr.mxu0 0.0
      %346 = vmatpush2.msra.mxu0 0.0
      %347 = vmatprep.subr.mxu0 0.0
      %348 = vmatpush2.msra.mxu0 0.0
      %349 = vmatprep.subr.mxu0 0.0
      %350 = vmatpush2.msra.mxu0 0.0
      %351 = vmatprep.subr.mxu0 0.0
      %352 = vmatpush2.msra.mxu0 0.0
      %353 = vmatprep.subr.mxu0 0.0
      %354 = vmatpush2.msra.mxu0 0.0
      %355 = vmatprep.subr.mxu0 0.0
      %356 = vmatpush2.msra.mxu0 0.0
      %357 = vmatprep.subr.mxu0 0.0
      %358 = vmatpush2.msra.mxu0 0.0
      %359 = vmatprep.subr.mxu0 0.0
      %360 = vmatpush2.msra.mxu0 0.0
      %361 = vmatprep.subr.mxu0 0.0
      %362 = vmatpush2.msra.mxu0 0.0
      %363 = vmatprep.subr.mxu0 0.0
      %364 = vmatpush2.msra.mxu0 0.0
      %365 = vmatprep.subr.mxu0 0.0
      %366 = vmatpush2.msra.mxu0 0.0
      %367 = vmatprep.subr.mxu0 0.0
      %368 = vmatpush2.msra.mxu0 0.0
      %369 = vmatprep.subr.mxu0 0.0
      %370 = vmatpush2.msra.mxu0 0.0
      %371 = vmatprep.subr.mxu0 0.0
      %372 = vmatpush2.msra.mxu0 0.0
      %373 = vmatprep.mubr.f32.mxu0 0.0
      %374 = vmatmul.mubr.f32.gmra.mxu0 %v282
      %v375 = vpop.f32.mrf.mxu0
      %v376 = vadd.f32 %v307, %v375
      %v377 = vpop.f32.mrf.mxu0
      %378 = vmatprep.mubr.f32.mxu0 0.0
      %379 = vmatmul.mubr.f32.gmra.mxu0 %v283
      %v380 = vpop.f32.mrf.mxu0
      %v381 = vadd.f32 %v307, %v380
      %v382 = vpop.f32.mrf.mxu0
      %383 = vmatprep.mubr.f32.mxu0 0.0
      %384 = vmatmul.mubr.f32.gmra.mxu0 %v284
      %v385 = vpop.f32.mrf.mxu0
      %v386 = vadd.f32 %v307, %v385
      %v387 = vpop.f32.mrf.mxu0
      %388 = vmatprep.mubr.f32.mxu0 0.0
      %389 = vmatmul.mubr.f32.gmra.mxu0 %v285
      %v390 = vpop.f32.mrf.mxu0
      %v391 = vadd.f32 %v307, %v390
      %v392 = vpop.f32.mrf.mxu0
      %393 = vdwg.mxu0
      %v394 = vmax.f32 %v376, 0.0
      %v395 = vmax.f32 %v381, 0.0
      %v396 = vmax.f32 %v386, 0.0
      %v397 = vmax.f32 %v391, 0.0
      %v398 = vld [vmem:[%s3] sm:$0xff]
      %v399 = vld [vmem:[%s3 + $0x8] sm:$0xff]
      %v400 = vld [vmem:[%s3 + $0x10] sm:$0xff]
      %v401 = vld [vmem:[%s3 + $0x18] sm:$0xff]
      %v402 = vld [vmem:[%s3 + $0x20] sm:$0xff]
      %v403 = vld [vmem:[%s3 + $0x28] sm:$0xff]
      %v404 = vld [vmem:[%s3 + $0x30] sm:$0xff]
      %v405 = vld [vmem:[%s3 + $0x38] sm:$0xff]
      %v406 = vld [vmem:[%s3 + $0x40] sm:$0xff]
      %v407 = vld [vmem:[%s3 + $0x48] sm:$0xff]
      %v408 = vld [vmem:[%s3 + $0x50] sm:$0xff]
      %v409 = vld [vmem:[%s3 + $0x58] sm:$0xff]
      %v410 = vld [vmem:[%s3 + $0x60] sm:$0xff]
      %v411 = vld [vmem:[%s3 + $0x68] sm:$0xff]
      %v412 = vld [vmem:[%s3 + $0x70] sm:$0xff]
      %v413 = vld [vmem:[%s3 + $0x78] sm:$0xff]
      %v414 = vld [vmem:[%s4] sm:$0x1]
      %v416 = vlaneseq
      %v417 = vshrl.u32 %v416, 7
      %v418 = vsub.s32 0, %v417
      %v419 = vrot.slane %v414, %v418
      %421 = vmatprep.subr.mxu0 0.0
      %422 = vmatpush1.msra.mxu0 %v413
      %423 = vmatprep.subr.mxu0 0.0
      %424 = vmatpush1.msra.mxu0 %v412
      %425 = vmatprep.subr.mxu0 0.0
      %426 = vmatpush1.msra.mxu0 %v411
      %427 = vmatprep.subr.mxu0 0.0
      %428 = vmatpush1.msra.mxu0 %v410
      %429 = vmatprep.subr.mxu0 0.0
      %430 = vmatpush1.msra.mxu0 %v409
      %431 = vmatprep.subr.mxu0 0.0
      %432 = vmatpush1.msra.mxu0 %v408
      %433 = vmatprep.subr.mxu0 0.0
      %434 = vmatpush1.msra.mxu0 %v407
      %435 = vmatprep.subr.mxu0 0.0
      %436 = vmatpush1.msra.mxu0 %v406
      %437 = vmatprep.subr.mxu0 0.0
      %438 = vmatpush1.msra.mxu0 %v405
      %439 = vmatprep.subr.mxu0 0.0
      %440 = vmatpush1.msra.mxu0 %v404
      %441 = vmatprep.subr.mxu0 0.0
      %442 = vmatpush1.msra.mxu0 %v403
      %443 = vmatprep.subr.mxu0 0.0
      %444 = vmatpush1.msra.mxu0 %v402
      %445 = vmatprep.subr.mxu0 0.0
      %446 = vmatpush1.msra.mxu0 %v401
      %447 = vmatprep.subr.mxu0 0.0
      %448 = vmatpush1.msra.mxu0 %v400
      %449 = vmatprep.subr.mxu0 0.0
      %450 = vmatpush1.msra.mxu0 %v399
      %451 = vmatprep.subr.mxu0 0.0
      %452 = vmatpush1.msra.mxu0 %v398
      %453 = vmatprep.subr.mxu0 0.0
      %454 = vmatpush2.msra.mxu0 0.0
      %455 = vmatprep.subr.mxu0 0.0
      %456 = vmatpush2.msra.mxu0 0.0
      %457 = vmatprep.subr.mxu0 0.0
      %458 = vmatpush2.msra.mxu0 0.0
      %459 = vmatprep.subr.mxu0 0.0
      %460 = vmatpush2.msra.mxu0 0.0
      %461 = vmatprep.subr.mxu0 0.0
      %462 = vmatpush2.msra.mxu0 0.0
      %463 = vmatprep.subr.mxu0 0.0
      %464 = vmatpush2.msra.mxu0 0.0
      %465 = vmatprep.subr.mxu0 0.0
      %466 = vmatpush2.msra.mxu0 0.0
      %467 = vmatprep.subr.mxu0 0.0
      %468 = vmatpush2.msra.mxu0 0.0
      %469 = vmatprep.subr.mxu0 0.0
      %470 = vmatpush2.msra.mxu0 0.0
      %471 = vmatprep.subr.mxu0 0.0
      %472 = vmatpush2.msra.mxu0 0.0
      %473 = vmatprep.subr.mxu0 0.0
      %474 = vmatpush2.msra.mxu0 0.0
      %475 = vmatprep.subr.mxu0 0.0
      %476 = vmatpush2.msra.mxu0 0.0
      %477 = vmatprep.subr.mxu0 0.0
      %478 = vmatpush2.msra.mxu0 0.0
      %479 = vmatprep.subr.mxu0 0.0
      %480 = vmatpush2.msra.mxu0 0.0
      %481 = vmatprep.subr.mxu0 0.0
      %482 = vmatpush2.msra.mxu0 0.0
      %483 = vmatprep.subr.mxu0 0.0
      %484 = vmatpush2.msra.mxu0 0.0
      %485 = vmatprep.mubr.f32.mxu0 0.0
      %486 = vmatmul.mubr.f32.gmra.mxu0 %v394
      %v487 = vpop.f32.mrf.mxu0
      %v488 = vadd.f32 %v419, %v487
      %v489 = vpop.f32.mrf.mxu0
      %490 = vmatprep.mubr.f32.mxu0 0.0
      %491 = vmatmul.mubr.f32.gmra.mxu0 %v395
      %v492 = vpop.f32.mrf.mxu0
      %v493 = vadd.f32 %v419, %v492
      %v494 = vpop.f32.mrf.mxu0
      %495 = vmatprep.mubr.f32.mxu0 0.0
      %496 = vmatmul.mubr.f32.gmra.mxu0 %v396
      %v497 = vpop.f32.mrf.mxu0
      %v498 = vadd.f32 %v419, %v497
      %v499 = vpop.f32.mrf.mxu0
      %500 = vmatprep.mubr.f32.mxu0 0.0
      %501 = vmatmul.mubr.f32.gmra.mxu0 %v397
      %v502 = vpop.f32.mrf.mxu0
      %v503 = vadd.f32 %v419, %v502
      %v504 = vpop.f32.mrf.mxu0
      %505 = vdwg.mxu0
      %v506 = vmax.f32 %v488, 0.0
      %v507 = vmax.f32 %v493, 0.0
      %v508 = vmax.f32 %v498, 0.0
      %v509 = vmax.f32 %v503, 0.0
      %v510 = vld [vmem:[%s5] sm:$0xff]
      %v511 = vld [vmem:[%s5 + $0x8] sm:$0xff]
      %v512 = vld [vmem:[%s5 + $0x10] sm:$0xff]
      %v513 = vld [vmem:[%s5 + $0x18] sm:$0xff]
      %v514 = vld [vmem:[%s5 + $0x20] sm:$0xff]
      %v515 = vld [vmem:[%s5 + $0x28] sm:$0xff]
      %v516 = vld [vmem:[%s5 + $0x30] sm:$0xff]
      %v517 = vld [vmem:[%s5 + $0x38] sm:$0xff]
      %v518 = vld [vmem:[%s5 + $0x40] sm:$0xff]
      %v519 = vld [vmem:[%s5 + $0x48] sm:$0xff]
      %v520 = vld [vmem:[%s5 + $0x50] sm:$0xff]
      %v521 = vld [vmem:[%s5 + $0x58] sm:$0xff]
      %v522 = vld [vmem:[%s5 + $0x60] sm:$0xff]
      %v523 = vld [vmem:[%s5 + $0x68] sm:$0xff]
      %v524 = vld [vmem:[%s5 + $0x70] sm:$0xff]
      %v525 = vld [vmem:[%s5 + $0x78] sm:$0xff]
      %v526 = vld [vmem:[%s6] sm:$0x1]
      %v528 = vlaneseq
      %v529 = vshrl.u32 %v528, 7
      %v530 = vsub.s32 0, %v529
      %v531 = vrot.slane %v526, %v530
      %533 = vmatprep.subr.mxu0 0.0
      %534 = vmatpush1.msra.mxu0 %v525
      %535 = vmatprep.subr.mxu0 0.0
      %536 = vmatpush1.msra.mxu0 %v524
      %537 = vmatprep.subr.mxu0 0.0
      %538 = vmatpush1.msra.mxu0 %v523
      %539 = vmatprep.subr.mxu0 0.0
      %540 = vmatpush1.msra.mxu0 %v522
      %541 = vmatprep.subr.mxu0 0.0
      %542 = vmatpush1.msra.mxu0 %v521
      %543 = vmatprep.subr.mxu0 0.0
      %544 = vmatpush1.msra.mxu0 %v520
      %545 = vmatprep.subr.mxu0 0.0
      %546 = vmatpush1.msra.mxu0 %v519
      %547 = vmatprep.subr.mxu0 0.0
      %548 = vmatpush1.msra.mxu0 %v518
      %549 = vmatprep.subr.mxu0 0.0
      %550 = vmatpush1.msra.mxu0 %v517
      %551 = vmatprep.subr.mxu0 0.0
      %552 = vmatpush1.msra.mxu0 %v516
      %553 = vmatprep.subr.mxu0 0.0
      %554 = vmatpush1.msra.mxu0 %v515
      %555 = vmatprep.subr.mxu0 0.0
      %556 = vmatpush1.msra.mxu0 %v514
      %557 = vmatprep.subr.mxu0 0.0
      %558 = vmatpush1.msra.mxu0 %v513
      %559 = vmatprep.subr.mxu0 0.0
      %560 = vmatpush1.msra.mxu0 %v512
      %561 = vmatprep.subr.mxu0 0.0
      %562 = vmatpush1.msra.mxu0 %v511
      %563 = vmatprep.subr.mxu0 0.0
      %564 = vmatpush1.msra.mxu0 %v510
      %565 = vmatprep.subr.mxu0 0.0
      %566 = vmatpush2.msra.mxu0 0.0
      %567 = vmatprep.subr.mxu0 0.0
      %568 = vmatpush2.msra.mxu0 0.0
      %569 = vmatprep.subr.mxu0 0.0
      %570 = vmatpush2.msra.mxu0 0.0
      %571 = vmatprep.subr.mxu0 0.0
      %572 = vmatpush2.msra.mxu0 0.0
      %573 = vmatprep.subr.mxu0 0.0
      %574 = vmatpush2.msra.mxu0 0.0
      %575 = vmatprep.subr.mxu0 0.0
      %576 = vmatpush2.msra.mxu0 0.0
      %577 = vmatprep.subr.mxu0 0.0
      %578 = vmatpush2.msra.mxu0 0.0
      %579 = vmatprep.subr.mxu0 0.0
      %580 = vmatpush2.msra.mxu0 0.0
      %581 = vmatprep.subr.mxu0 0.0
      %582 = vmatpush2.msra.mxu0 0.0
      %583 = vmatprep.subr.mxu0 0.0
      %584 = vmatpush2.msra.mxu0 0.0
      %585 = vmatprep.subr.mxu0 0.0
      %586 = vmatpush2.msra.mxu0 0.0
      %587 = vmatprep.subr.mxu0 0.0
      %588 = vmatpush2.msra.mxu0 0.0
      %589 = vmatprep.subr.mxu0 0.0
      %590 = vmatpush2.msra.mxu0 0.0
      %591 = vmatprep.subr.mxu0 0.0
      %592 = vmatpush2.msra.mxu0 0.0
      %593 = vmatprep.subr.mxu0 0.0
      %594 = vmatpush2.msra.mxu0 0.0
      %595 = vmatprep.subr.mxu0 0.0
      %596 = vmatpush2.msra.mxu0 0.0
      %597 = vmatprep.mubr.f32.mxu0 0.0
      %598 = vmatmul.mubr.f32.gmra.mxu0 %v506
      %v599 = vpop.f32.mrf.mxu0
      %v600 = vadd.f32 %v531, %v599
      %v601 = vpop.f32.mrf.mxu0
      %602 = vmatprep.mubr.f32.mxu0 0.0
      %603 = vmatmul.mubr.f32.gmra.mxu0 %v507
      %v604 = vpop.f32.mrf.mxu0
      %v605 = vadd.f32 %v531, %v604
      %v606 = vpop.f32.mrf.mxu0
      %607 = vmatprep.mubr.f32.mxu0 0.0
      %608 = vmatmul.mubr.f32.gmra.mxu0 %v508
      %v609 = vpop.f32.mrf.mxu0
      %v610 = vadd.f32 %v531, %v609
      %v611 = vpop.f32.mrf.mxu0
      %612 = vmatprep.mubr.f32.mxu0 0.0
      %613 = vmatmul.mubr.f32.gmra.mxu0 %v509
      %v614 = vpop.f32.mrf.mxu0
      %v615 = vadd.f32 %v531, %v614
      %v616 = vpop.f32.mrf.mxu0
      %617 = vdwg.mxu0
      %618 = vst [vmem:[%s280] sm:$0xff] %v600
      %619 = vst [vmem:[%s280 + $0x8] sm:$0xff] %v605
      %620 = vst [vmem:[%s280 + $0x10] sm:$0xff] %v610
      %621 = vst [vmem:[%s280 + $0x18] sm:$0xff] %v615
      %s622 = smul.u32 4, %s18
      %p623 = scmp.lt.s32.totalorder %s622, 7
      %s624 = scalar_select %p623, %s622, 7
      %s625 = smul.addr %s624, 8
      %s626 = scalar_lea.vmem %s7, %s625
      // Predicated region
      $region49: #{neural_network_forward.1} parent=47 // pred_check
        %p627 = pneg %p188
      $region50: #{neural_network_forward.1} parent=47 // pred_check_branch
        %629 = sbr.rel (%p627) target = $region52
      $region51: #{neural_network_forward.1} parent=47 // pred_region
        %s630 = smul.u32 4, %s18
      $region52: #{neural_network_forward.1} parent=47 // pred_fallthru
        _
    $region48: #{neural_network_forward.1} parent=5 // pred_fallthru
      _
    %p631 = scmp.le.s32.totalorder 2, %s13
    // Predicated region
    $region53: #{neural_network_forward.1} parent=5 // pred_check
      %p632 = pneg %p631
    $region54: #{neural_network_forward.1} parent=5 // pred_check_branch
      %634 = sbr.rel (%p632) target = $region56
    $region55: #{neural_network_forward.1} parent=5 // pred_region
      %s635 = ssub.s32 %s13, 2
      // Predicated region
      $region57: #{neural_network_forward.1} parent=55 // pred_check
        %p636 = pneg %p194
      $region58: #{neural_network_forward.1} parent=55 // pred_check_branch
        %638 = sbr.rel (%p636) target = $region60
      $region59: #{neural_network_forward.1} parent=55 // pred_region
        %s639 = smul.u32 4, %s19
        %p640 = scmp.lt.s32.totalorder %s639, 7
        %s641 = scalar_select %p640, %s639, 7
        %s642 = smul.addr %s641, 8
        %s643 = scalar_lea.vmem %s7, %s642
      $region60: #{neural_network_forward.1} parent=55 // pred_fallthru
        _
    $region56: #{neural_network_forward.1} parent=5 // pred_fallthru
      _
  $region6: #{neural_network_forward.1} parent=0 // loop_footer
    %s17 = sadd.s32 1, %s13
  $region7: #{neural_network_forward.1} parent=0 // loop_footer_branch
    %12 = sbr.rel target = $region3
  $region8: #{neural_network_forward.1} parent=0 // loop_exit
    _

</llo_original>
